<compile_context>
chip_gen: v5e
topology: v5e:2x2
jax: 0.10.0
libtpu: 0.0.40
codegen_flags: <defaults>
</compile_context>

<pallas_src>
import functools
import math

import jax
import jax.numpy as jnp
import numpy as np
from jax.experimental import pallas as pl
from jax.experimental.pallas import tpu as pltpu

_LANE = 128
_SUBLANE = 8
_ROW_ALIGN = 256   # native MXU tile on v6e/v7x; harmless (2 passes) on v5e


def _round_up(n, m):
    return (n + m - 1) // m * m


def _erf(x):
    # Abramowitz & Stegun 7.1.26, |error| <= 1.5e-7.  Uses only supported
    # elementwise ops (mul/div/exp/where), so it always lowers on Mosaic.
    p = 0.3275911
    a1, a2, a3, a4, a5 = (0.254829592, -0.284496736, 1.421413741,
                          -1.453152027, 1.061405429)
    ax = jnp.abs(x)
    t = 1.0 / (1.0 + p * ax)
    poly = t * (a1 + t * (a2 + t * (a3 + t * (a4 + t * a5))))
    y = 1.0 - poly * jnp.exp(-ax * ax)
    return jnp.where(x >= 0, y, -y)


def _gelu_exact(x):
    # nn.GELU default: exact erf-based GELU.
    return 0.5 * x * (1.0 + _erf(x * (1.0 / math.sqrt(2.0))))


def _gelu_tanh(x):
    # Opt-in tanh approximation (transcendental goes to the EUP slot).
    c = math.sqrt(2.0 / math.pi)
    return 0.5 * x * (1.0 + jnp.tanh(c * (x + 0.044715 * x * x * x)))


def _vmem_capacity_bytes():
    try:
        info = pltpu.get_tpu_info()
        cap = getattr(info, "vmem_capacity_bytes", None)
        if cap:
            return int(cap)
    except Exception:
        pass
    return 64 << 20   # conservative default (v7x per-TC VMEM)


def mlp_kernel(x_ref, w1_ref, b1_ref, w2_ref, b2_ref, o_ref, acc_ref, *,
               gelu_fn):
    f32 = jnp.float32
    k = pl.program_id(1)

    @pl.when(k == 0)
    def _init():
        acc_ref[...] = jnp.zeros_like(acc_ref)

    # fc1 chunk (MXU, f32 accumulation) + bias + GELU on this hidden chunk.
    h = jnp.dot(x_ref[...], w1_ref[...], preferred_element_type=f32)
    h = gelu_fn(h + b1_ref[...].astype(f32))

    # fc2 partial product for this hidden chunk, accumulated in f32 scratch.
    acc_ref[...] += jnp.dot(h.astype(w2_ref.dtype), w2_ref[...],
                            preferred_element_type=f32)

    @pl.when(k == pl.num_programs(1) - 1)
    def _finalize():
        o_ref[...] = (acc_ref[...] + b2_ref[...].astype(f32)).astype(o_ref.dtype)


def mlp_forward(x, params, *, block_rows=512, hidden_block=512,
                weight_dtype=jnp.bfloat16, approximate_gelu=False):
    """Runs fc1 -> GELU -> fc2 on x of shape (..., input_size)."""
    out_dtype = x.dtype
    w1 = params['w1'].astype(weight_dtype)
    w2 = params['w2'].astype(weight_dtype)
    d_in, hidden = w1.shape
    d_out = w2.shape[-1]
    b1 = params['b1'].reshape(1, hidden).astype(jnp.float32)
    b2 = params['b2'].reshape(1, d_out).astype(jnp.float32)

    # ---- flatten leading dims, cast x to the compute dtype host-side ----
    lead_shape = x.shape[:-1]
    x2 = x.reshape(-1, d_in).astype(weight_dtype)
    n_rows = x2.shape[0]

    # ---- lane / MXU padding targets ----
    d_in_p = _round_up(d_in, _LANE)
    out_p = _round_up(d_out, _LANE)

    # ---- tile sizes, shrunk until they fit the per-generation VMEM budget --
    item_c = jnp.dtype(weight_dtype).itemsize
    item_o = jnp.dtype(out_dtype).itemsize

    tm = min(_round_up(block_rows, _ROW_ALIGN), _round_up(n_rows, _SUBLANE))
    tk_h = min(_round_up(hidden_block, _LANE), _round_up(hidden, _LANE))

    def vmem_need(tm_, tk_):
        return (2 * tm_ * d_in_p * item_c        # x tile (double-buffered)
                + 2 * d_in_p * tk_ * item_c      # w1 chunk
                + 2 * tk_ * 4                    # b1 chunk (f32)
                + 2 * tk_ * out_p * item_c       # w2 chunk
                + 2 * out_p * 4                  # b2
                + 2 * tm_ * out_p * item_o       # out tile
                + tm_ * out_p * 4                # f32 accumulator scratch
                + tm_ * tk_ * (4 + item_c))      # h (f32) + cast for fc2

    vmem_cap = _vmem_capacity_bytes()
    budget = int(0.70 * vmem_cap)
    while vmem_need(tm, tk_h) > budget and tk_h > _LANE:
        tk_h = max(_LANE, _round_up(tk_h // 2, _LANE))
    while vmem_need(tm, tk_h) > budget and tm > _SUBLANE:
        tm = max(_SUBLANE, _round_up(tm // 2, _SUBLANE))

    hid_p = _round_up(hidden, tk_h)
    rows_p = _round_up(n_rows, tm)

    # ---- host-side zero padding (mathematical no-op) ----
    if d_in_p != d_in:
        x2 = jnp.pad(x2, ((0, 0), (0, d_in_p - d_in)))
        w1 = jnp.pad(w1, ((0, d_in_p - d_in), (0, 0)))
    if hid_p != hidden:
        w1 = jnp.pad(w1, ((0, 0), (0, hid_p - hidden)))
        b1 = jnp.pad(b1, ((0, 0), (0, hid_p - hidden)))
        w2 = jnp.pad(w2, ((0, hid_p - hidden), (0, 0)))
    if out_p != d_out:
        w2 = jnp.pad(w2, ((0, 0), (0, out_p - d_out)))
        b2 = jnp.pad(b2, ((0, 0), (0, out_p - d_out)))
    if rows_p != n_rows:
        x2 = jnp.pad(x2, ((0, rows_p - n_rows), (0, 0)))

    grid_rows = rows_p // tm
    grid_k = hid_p // tk_h
    grid = (grid_rows, grid_k)

    # ---- cost estimate (weights streamed once per row tile, biases tiny) ---
    def nbytes(shape, dtype):
        return int(np.prod(shape)) * jnp.dtype(dtype).itemsize

    w_streams = grid_rows if grid_k > 1 else 1
    cost = pl.CostEstimate(
        flops=2 * rows_p * d_in_p * hid_p + 2 * rows_p * hid_p * out_p,
        transcendentals=rows_p * hid_p,   # exp (erf) or tanh in GELU
        bytes_accessed=(nbytes((rows_p, d_in_p), weight_dtype)
                        + nbytes((rows_p, out_p), out_dtype)
                        + w_streams * (nbytes(w1.shape, weight_dtype)
                                       + nbytes(w2.shape, weight_dtype)
                                       + nbytes(b1.shape, jnp.float32))
                        + nbytes(b2.shape, jnp.float32)),
    )

    vmem_limit = min(int(0.85 * vmem_cap),
                     max(32 << 20, int(1.6 * vmem_need(tm, tk_h))))

    kernel = functools.partial(
        mlp_kernel, gelu_fn=_gelu_tanh if approximate_gelu else _gelu_exact)

    out = pl.pallas_call(
        kernel,
        out_shape=jax.ShapeDtypeStruct((rows_p, out_p), out_dtype),
        grid=grid,
        in_specs=[
            pl.BlockSpec((tm, d_in_p), lambda i, k: (i, 0)),    # x row-block
            pl.BlockSpec((d_in_p, tk_h), lambda i, k: (0, k)),  # fc1 W chunk
            pl.BlockSpec((1, tk_h), lambda i, k: (0, k)),       # fc1 bias chunk
            pl.BlockSpec((tk_h, out_p), lambda i, k: (k, 0)),   # fc2 W chunk
            pl.BlockSpec((1, out_p), lambda i, k: (0, 0)),      # fc2 bias
        ],
        out_specs=pl.BlockSpec((tm, out_p), lambda i, k: (i, 0)),
        scratch_shapes=[pltpu.VMEM((tm, out_p), jnp.float32)],
        compiler_params=pltpu.CompilerParams(
            dimension_semantics=("parallel", "arbitrary"),
            vmem_limit_bytes=vmem_limit),
        cost_estimate=cost,
    )(x2, w1, b1, w2, b2)

    out = out[:n_rows, :d_out]
    return out.reshape(*lead_shape, d_out)


def mlp_reference(x, params):
    """Pure-JAX reference mirroring the PyTorch forward pass (exact GELU)."""
    h = x @ params['w1'] + params['b1'].reshape(-1)
    h = 0.5 * h * (1.0 + jax.scipy.special.erf(h / math.sqrt(2.0)))
    return h @ params['w2'] + params['b2'].reshape(-1)


if __name__ == "__main__":
    batch, seq, input_size, hidden_size, output_size = 2, 8, 32, 64, 16

    key = jax.random.PRNGKey(0)
    kx, k1, k2, k3, k4 = jax.random.split(key, 5)
    x = jax.random.normal(kx, (batch, seq, input_size), jnp.float32)
    params = dict(
        w1=0.05 * jax.random.normal(k1, (input_size, hidden_size), jnp.float32),
        b1=0.05 * jax.random.normal(k2, (hidden_size,), jnp.float32),
        w2=0.05 * jax.random.normal(k3, (hidden_size, output_size), jnp.float32),
        b2=0.05 * jax.random.normal(k4, (output_size,), jnp.float32),
    )

    ref = mlp_reference(x, params)

    # f32 compute path: strict parity with the PyTorch/JAX reference.
    out_f32 = jax.block_until_ready(
        mlp_forward(x, params, weight_dtype=jnp.float32))
    np.testing.assert_allclose(np.asarray(out_f32), np.asarray(ref),
                               rtol=1e-3, atol=1e-3)

    # Default bf16 compute path (MXU-native on v6e/v7x), f32 accumulation.
    out_bf16 = jax.block_until_ready(mlp_forward(x, params))
    np.testing.assert_allclose(np.asarray(out_bf16), np.asarray(ref),
                               rtol=3e-2, atol=3e-2)

    print("KERNEL_OK")
</pallas_src>

<mosaic_0001>
module attributes {stable_mosaic.version = 11 : i64} {
  func.func @mlp_kernel(%arg0: i32, %arg1: i32, %arg2: memref<16x128xf32, #tpu.memory_space<vmem>>, %arg3: memref<128x128xf32, #tpu.memory_space<vmem>>, %arg4: memref<1x128xf32, #tpu.memory_space<vmem>>, %arg5: memref<128x128xf32, #tpu.memory_space<vmem>>, %arg6: memref<1x128xf32, #tpu.memory_space<vmem>>, %arg7: memref<16x128xf32, #tpu.memory_space<vmem>>, %arg8: memref<16x128xf32, #tpu.memory_space<vmem>>) attributes {dimension_semantics = [#tpu.dimension_semantics<parallel>, #tpu.dimension_semantics<arbitrary>], iteration_bounds = array<i64: 1, 1>, scalar_prefetch = 0 : i64, scratch_operands = 1 : i64, tpu.core_type = #tpu.core_type<tc>, window_params = [{transform_indices = @transform_0, window_bounds = array<i64: 16, 128>}, {transform_indices = @transform_1, window_bounds = array<i64: 128, 128>}, {transform_indices = @transform_2, window_bounds = array<i64: 1, 128>}, {transform_indices = @transform_3, window_bounds = array<i64: 128, 128>}, {pipeline_mode = #tpu.pipeline_mode<synchronous>, transform_indices = @transform_4, window_bounds = array<i64: 1, 128>}, {transform_indices = @transform_5, window_bounds = array<i64: 16, 128>}]} {
    %c0_i32 = arith.constant 0 : i32
    %0 = arith.cmpi eq, %arg1, %c0_i32 : i32
    %1 = arith.extui %0 : i1 to i32
    %c0_i32_0 = arith.constant 0 : i32
    %2 = arith.cmpi ne, %1, %c0_i32_0 : i32
    scf.if %2 {
      %cst_30 = arith.constant 0.000000e+00 : f32
      %57 = vector.broadcast %cst_30 : f32 to vector<16x128xf32>
      %c0_31 = arith.constant 0 : index
      %c0_32 = arith.constant 0 : index
      %58 = vector.load %arg8[%c0_31, %c0_32] : memref<16x128xf32, #tpu.memory_space<vmem>>, vector<16x128xf32>
      tpu.vector_store %arg8[%c0_31, %c0_32], %57 {strides = array<i32>} : memref<16x128xf32, #tpu.memory_space<vmem>>, vector<16x128xf32>,
    } else {
    }
    %c0 = arith.constant 0 : index
    %c0_1 = arith.constant 0 : index
    %3 = vector.load %arg2[%c0, %c0_1] : memref<16x128xf32, #tpu.memory_space<vmem>>, vector<16x128xf32>
    %c0_2 = arith.constant 0 : index
    %c0_3 = arith.constant 0 : index
    %4 = vector.load %arg3[%c0_2, %c0_3] : memref<128x128xf32, #tpu.memory_space<vmem>>, vector<128x128xf32>
    %cst = arith.constant dense<0.000000e+00> : vector<16x128xf32>
    %5 = tpu.matmul %3, %4, %cst {dimension_numbers = #tpu.dot_dimension_numbers<[1], [0], [0], [1], [0, 0, 1, 1], [], []>} : vector<16x128xf32>, vector<128x128xf32>, vector<16x128xf32> -> vector<16x128xf32>
    %c0_4 = arith.constant 0 : index
    %c0_5 = arith.constant 0 : index
    %6 = vector.load %arg4[%c0_4, %c0_5] : memref<1x128xf32, #tpu.memory_space<vmem>>, vector<1x128xf32>
    %7 = vector.broadcast %6 : vector<1x128xf32> to vector<16x128xf32>
    %8 = arith.addf %5, %7 : vector<16x128xf32>
    %cst_6 = arith.constant 5.000000e-01 : f32
    %9 = vector.broadcast %cst_6 : f32 to vector<16x128xf32>
    %10 = arith.mulf %9, %8 : vector<16x128xf32>
    %cst_7 = arith.constant 0.707106769 : f32
    %11 = vector.broadcast %cst_7 : f32 to vector<16x128xf32>
    %12 = arith.mulf %8, %11 : vector<16x128xf32>
    %13 = math.absf %12 : vector<16x128xf32>
    %cst_8 = arith.constant 0.327591091 : f32
    %14 = vector.broadcast %cst_8 : f32 to vector<16x128xf32>
    %15 = arith.mulf %14, %13 : vector<16x128xf32>
    %cst_9 = arith.constant 1.000000e+00 : f32
    %16 = vector.broadcast %cst_9 : f32 to vector<16x128xf32>
    %17 = arith.addf %16, %15 : vector<16x128xf32>
    %cst_10 = arith.constant 1.000000e+00 : f32
    %18 = vector.broadcast %cst_10 : f32 to vector<16x128xf32>
    %19 = arith.divf %18, %17 : vector<16x128xf32>
    %cst_11 = arith.constant 1.06140542 : f32
    %20 = vector.broadcast %cst_11 : f32 to vector<16x128xf32>
    %21 = arith.mulf %19, %20 : vector<16x128xf32>
    %cst_12 = arith.constant -1.45315206 : f32
    %22 = vector.broadcast %cst_12 : f32 to vector<16x128xf32>
    %23 = arith.addf %22, %21 : vector<16x128xf32>
    %24 = arith.mulf %19, %23 : vector<16x128xf32>
    %cst_13 = arith.constant 1.42141378 : f32
    %25 = vector.broadcast %cst_13 : f32 to vector<16x128xf32>
    %26 = arith.addf %25, %24 : vector<16x128xf32>
    %27 = arith.mulf %19, %26 : vector<16x128xf32>
    %cst_14 = arith.constant -0.284496725 : f32
    %28 = vector.broadcast %cst_14 : f32 to vector<16x128xf32>
    %29 = arith.addf %28, %27 : vector<16x128xf32>
    %30 = arith.mulf %19, %29 : vector<16x128xf32>
    %cst_15 = arith.constant 0.254829586 : f32
    %31 = vector.broadcast %cst_15 : f32 to vector<16x128xf32>
    %32 = arith.addf %31, %30 : vector<16x128xf32>
    %33 = arith.mulf %19, %32 : vector<16x128xf32>
    %cst_16 = arith.constant 0.000000e+00 : f32
    %34 = vector.broadcast %cst_16 : f32 to vector<16x128xf32>
    %35 = arith.subf %34, %13 : vector<16x128xf32>
    %36 = arith.mulf %35, %13 : vector<16x128xf32>
    %37 = math.exp %36 : vector<16x128xf32>
    %38 = arith.mulf %33, %37 : vector<16x128xf32>
    %cst_17 = arith.constant 1.000000e+00 : f32
    %39 = vector.broadcast %cst_17 : f32 to vector<16x128xf32>
    %40 = arith.subf %39, %38 : vector<16x128xf32>
    %cst_18 = arith.constant 0.000000e+00 : f32
    %41 = vector.broadcast %cst_18 : f32 to vector<16x128xf32>
    %42 = arith.cmpf oge, %12, %41 : vector<16x128xf32>
    %cst_19 = arith.constant 0.000000e+00 : f32
    %43 = vector.broadcast %cst_19 : f32 to vector<16x128xf32>
    %44 = arith.subf %43, %40 : vector<16x128xf32>
    %45 = arith.select %42, %40, %44 : vector<16x128xi1>, vector<16x128xf32>
    %cst_20 = arith.constant 1.000000e+00 : f32
    %46 = vector.broadcast %cst_20 : f32 to vector<16x128xf32>
    %47 = arith.addf %46, %45 : vector<16x128xf32>
    %48 = arith.mulf %10, %47 : vector<16x128xf32>
    %c0_21 = arith.constant 0 : index
    %c0_22 = arith.constant 0 : index
    %49 = vector.load %arg8[%c0_21, %c0_22] : memref<16x128xf32, #tpu.memory_space<vmem>>, vector<16x128xf32>
    %c0_23 = arith.constant 0 : index
    %c0_24 = arith.constant 0 : index
    %50 = vector.load %arg5[%c0_23, %c0_24] : memref<128x128xf32, #tpu.memory_space<vmem>>, vector<128x128xf32>
    %cst_25 = arith.constant dense<0.000000e+00> : vector<16x128xf32>
    %51 = tpu.matmul %48, %50, %cst_25 {dimension_numbers = #tpu.dot_dimension_numbers<[1], [0], [0], [1], [0, 0, 1, 1], [], []>} : vector<16x128xf32>, vector<128x128xf32>, vector<16x128xf32> -> vector<16x128xf32>
    %52 = arith.addf %49, %51 : vector<16x128xf32>
    %c0_26 = arith.constant 0 : index
    %c0_27 = arith.constant 0 : index
    %53 = vector.load %arg8[%c0_26, %c0_27] : memref<16x128xf32, #tpu.memory_space<vmem>>, vector<16x128xf32>
    tpu.vector_store %arg8[%c0_26, %c0_27], %52 {strides = array<i32>} : memref<16x128xf32, #tpu.memory_space<vmem>>, vector<16x128xf32>,
    %c0_i32_28 = arith.constant 0 : i32
    %54 = arith.cmpi eq, %arg1, %c0_i32_28 : i32
    %55 = arith.extui %54 : i1 to i32
    %c0_i32_29 = arith.constant 0 : i32
    %56 = arith.cmpi ne, %55, %c0_i32_29 : i32
    scf.if %56 {
      %c0_30 = arith.constant 0 : index
      %c0_31 = arith.constant 0 : index
      %57 = vector.load %arg8[%c0_30, %c0_31] : memref<16x128xf32, #tpu.memory_space<vmem>>, vector<16x128xf32>
      %c0_32 = arith.constant 0 : index
      %c0_33 = arith.constant 0 : index
      %58 = vector.load %arg6[%c0_32, %c0_33] : memref<1x128xf32, #tpu.memory_space<vmem>>, vector<1x128xf32>
      %59 = vector.broadcast %58 : vector<1x128xf32> to vector<16x128xf32>
      %60 = arith.addf %57, %59 : vector<16x128xf32>
      %c0_34 = arith.constant 0 : index
      %c0_35 = arith.constant 0 : index
      %61 = vector.load %arg7[%c0_34, %c0_35] : memref<16x128xf32, #tpu.memory_space<vmem>>, vector<16x128xf32>
      tpu.vector_store %arg7[%c0_34, %c0_35], %60 {strides = array<i32>} : memref<16x128xf32, #tpu.memory_space<vmem>>, vector<16x128xf32>,
    } else {
    }
    return
  }
  func.func @transform_0(%arg0: i32, %arg1: i32) -> (i32, i32) {
    %c0_i32 = arith.constant 0 : i32
    %c0_i32_0 = arith.constant 0 : i32
    return %arg0, %c0_i32 : i32, i32
  }
  func.func @transform_1(%arg0: i32, %arg1: i32) -> (i32, i32) {
    %c0_i32 = arith.constant 0 : i32
    %c0_i32_0 = arith.constant 0 : i32
    return %c0_i32, %arg1 : i32, i32
  }
  func.func @transform_2(%arg0: i32, %arg1: i32) -> (i32, i32) {
    %c0_i32 = arith.constant 0 : i32
    %c0_i32_0 = arith.constant 0 : i32
    return %c0_i32, %arg1 : i32, i32
  }
  func.func @transform_3(%arg0: i32, %arg1: i32) -> (i32, i32) {
    %c0_i32 = arith.constant 0 : i32
    %c0_i32_0 = arith.constant 0 : i32
    return %arg1, %c0_i32 : i32, i32
  }
  func.func @transform_4(%arg0: i32, %arg1: i32) -> (i32, i32) {
    %c0_i32 = arith.constant 0 : i32
    %c0_i32_0 = arith.constant 0 : i32
    %c0_i32_1 = arith.constant 0 : i32
    return %c0_i32, %c0_i32_0 : i32, i32
  }
  func.func @transform_5(%arg0: i32, %arg1: i32) -> (i32, i32) {
    %c0_i32 = arith.constant 0 : i32
    %c0_i32_0 = arith.constant 0 : i32
    return %arg0, %c0_i32 : i32, i32
  }
}

</mosaic_0001>

<llo_original>
// kernel: tpu_custom_call.1
$region0: #{tpu_custom_call.1}
  #allocation0 [shape = 'u32[]', space=smem, size = 0x4, offset = 0x4, fixed_abs, tag = 'smem constant byte address 0x4 - core index']
  #allocation1 [shape = 'u32[72,128]{1,0:T(1,128)}', space=vmem, size = 0x9000, scoped, tag = 'internal scratch']
  #allocation2 [shape = 'f32[16,128]{1,0:T(8,128)}', space=vmem, size = 0x2000, scoped, tag = 'scratch operand']
  %s0 = inlined_call_operand.hbm [shape: f32[16,128], index: 0, kind: input, shape index: {}]
  %s1 = inlined_call_operand.hbm [shape: f32[128,128], index: 1, kind: input, shape index: {}]
  %s2 = inlined_call_operand.vmem [shape: f32[1,128], index: 2, kind: input, shape index: {}]
  %s3 = inlined_call_operand.hbm [shape: f32[128,128], index: 3, kind: input, shape index: {}]
  %s4 = inlined_call_operand.vmem [shape: f32[1,128], index: 4, kind: input, shape index: {}]
  %s5 = inlined_call_operand.hbm [shape: f32[16,128], index: 5, kind: output, shape index: {}]
  %s6 = sld [smem:[#allocation0]]
  $region50: #{tpu_custom_call.1} parent=0
    _
  %s8 = ssub.s32 1, %s6
  %s9 = scalar_select 0, %s8, %s6
  $region1: #{tpu_custom_call.1} parent=0
    #allocation3 [shape = 'u8[8192]{0}', space=vmem, size = 0x2000, scoped, tag = 'input window, operand 0, single buffered']
    #allocation4 [shape = 's32[1]{0}', space=sflag, size = 0x4, scoped, tag = 'scoped memory for tpu_custom_call.1']
    #allocation5 [shape = 's32[1]{0}', space=sflag, size = 0x4, scoped, tag = 'scoped memory for tpu_custom_call.1']
    #allocation6 [shape = 'u8[65536]{0}', space=vmem, size = 0x10000, scoped, tag = 'input window, operand 1, single buffered']
    #allocation7 [shape = 's32[1]{0}', space=sflag, size = 0x4, scoped, tag = 'scoped memory for tpu_custom_call.1']
    #allocation8 [shape = 'u8[65536]{0}', space=vmem, size = 0x10000, scoped, tag = 'input window, operand 3, single buffered']
    #allocation9 [shape = 'u8[8192]{0}', space=vmem, size = 0x2000, scoped, tag = 'output window, operand 0, single buffered']
    %10 = vsyncpa [#allocation4], 0
    %11 = vsyncpa [#allocation7], 0
    %12 = vsyncpa [#allocation5], 0
    // Predicated region
    $region2: #{tpu_custom_call.1} parent=1 // pred_check
      _
    $region3: #{tpu_custom_call.1} parent=1 // pred_check_branch
      %14 = sbr.rel (0) target = $region5
    $region4: #{tpu_custom_call.1} parent=1 // pred_region
      %16 = vsyncadd [#allocation4], 0
      %s17 = sshll.u32 %s0, 4
      %s18 = int_to_ptr.hbm [resolvable:$true] %s17
      %s19 = sshll.u32 [#allocation3], 4
      %s20 = int_to_ptr.vmem [resolvable:$true] %s19
      %25 = dma.hbm_to_vmem [thread:$0]  %s18, 256, %s20, [#allocation4], 128, 128, 8
    $region5: #{tpu_custom_call.1} parent=1 // pred_fallthru
      _
    // Predicated region
    $region6: #{tpu_custom_call.1} parent=1 // pred_check
      _
    $region7: #{tpu_custom_call.1} parent=1 // pred_check_branch
      %27 = sbr.rel (0) target = $region9
    $region8: #{tpu_custom_call.1} parent=1 // pred_region
      %29 = vsyncadd [#allocation7], 0
      %s30 = sshll.u32 %s1, 4
      %s31 = int_to_ptr.hbm [resolvable:$true] %s30
      %s32 = sshll.u32 [#allocation6], 4
      %s33 = int_to_ptr.vmem [resolvable:$true] %s32
      %38 = dma.hbm_to_vmem [thread:$0]  %s31, 2048, %s33, [#allocation7], 128, 128, 8
    $region9: #{tpu_custom_call.1} parent=1 // pred_fallthru
      _
    // Predicated region
    $region10: #{tpu_custom_call.1} parent=1 // pred_check
      _
    $region11: #{tpu_custom_call.1} parent=1 // pred_check_branch
      %40 = sbr.rel (0) target = $region13
    $region12: #{tpu_custom_call.1} parent=1 // pred_region
      _
    $region13: #{tpu_custom_call.1} parent=1 // pred_fallthru
      _
    // Predicated region
    $region14: #{tpu_custom_call.1} parent=1 // pred_check
      _
    $region15: #{tpu_custom_call.1} parent=1 // pred_check_branch
      %42 = sbr.rel (0) target = $region17
    $region16: #{tpu_custom_call.1} parent=1 // pred_region
      %44 = vsyncadd [#allocation7], 0
      %s45 = sshll.u32 %s3, 4
      %s46 = int_to_ptr.hbm [resolvable:$true] %s45
      %s47 = sshll.u32 [#allocation8], 4
      %s48 = int_to_ptr.vmem [resolvable:$true] %s47
      %53 = dma.hbm_to_vmem [thread:$0]  %s46, 2048, %s48, [#allocation7], 128, 128, 8
    $region17: #{tpu_custom_call.1} parent=1 // pred_fallthru
      _
    // Predicated region
    $region18: #{tpu_custom_call.1} parent=1 // pred_check
      _
    $region19: #{tpu_custom_call.1} parent=1 // pred_check_branch
      %55 = sbr.rel (0) target = $region21
    $region20: #{tpu_custom_call.1} parent=1 // pred_region
      _
    $region21: #{tpu_custom_call.1} parent=1 // pred_fallthru
      _
    // Predicated region
    $region22: #{tpu_custom_call.1} parent=1 // pred_check
      _
    $region23: #{tpu_custom_call.1} parent=1 // pred_check_branch
      %57 = sbr.rel (0) target = $region25
    $region24: #{tpu_custom_call.1} parent=1 // pred_region
      %59 = dma.done [#allocation4], 256
    $region25: #{tpu_custom_call.1} parent=1 // pred_fallthru
      _
    // Predicated region
    $region26: #{tpu_custom_call.1} parent=1 // pred_check
      _
    $region27: #{tpu_custom_call.1} parent=1 // pred_check_branch
      %61 = sbr.rel (0) target = $region29
    $region28: #{tpu_custom_call.1} parent=1 // pred_region
      %63 = dma.done [#allocation7], 2048
    $region29: #{tpu_custom_call.1} parent=1 // pred_fallthru
      _
    // Predicated region
    $region30: #{tpu_custom_call.1} parent=1 // pred_check
      _
    $region31: #{tpu_custom_call.1} parent=1 // pred_check_branch
      %65 = sbr.rel (0) target = $region33
    $region32: #{tpu_custom_call.1} parent=1 // pred_region
      %67 = dma.done [#allocation7], 2048
    $region33: #{tpu_custom_call.1} parent=1 // pred_fallthru
      _
    %p68 = scmp.eq.s32.totalorder 0, 0
    // Predicated region
    $region34: #{tpu_custom_call.1} parent=1 // pred_check
      %p69 = pneg %p68
    $region35: #{tpu_custom_call.1} parent=1 // pred_check_branch
      %71 = sbr.rel (%p69) target = $region37
    $region36: #{tpu_custom_call.1} parent=1 // pred_region
      %72 = vst [vmem:[#allocation2] sm:$0xff] 0.0
      %73 = vst [vmem:[#allocation2 + $0x8] sm:$0xff] 0.0
    $region37: #{tpu_custom_call.1} parent=1 // pred_fallthru
      _
    %v74 = vld [vmem:[#allocation3] sm:$0xff]
    %v75 = vld [vmem:[#allocation3 + $0x8] sm:$0xff]
    %v76 = vld [vmem:[#allocation6] sm:$0xff]
    %v77 = vld [vmem:[#allocation6 + $0x8] sm:$0xff]
    %v78 = vld [vmem:[#allocation6 + $0x10] sm:$0xff]
    %v79 = vld [vmem:[#allocation6 + $0x18] sm:$0xff]
    %v80 = vld [vmem:[#allocation6 + $0x20] sm:$0xff]
    %v81 = vld [vmem:[#allocation6 + $0x28] sm:$0xff]
    %v82 = vld [vmem:[#allocation6 + $0x30] sm:$0xff]
    %v83 = vld [vmem:[#allocation6 + $0x38] sm:$0xff]
    %v84 = vld [vmem:[#allocation6 + $0x40] sm:$0xff]
    %v85 = vld [vmem:[#allocation6 + $0x48] sm:$0xff]
    %v86 = vld [vmem:[#allocation6 + $0x50] sm:$0xff]
    %v87 = vld [vmem:[#allocation6 + $0x58] sm:$0xff]
    %v88 = vld [vmem:[#allocation6 + $0x60] sm:$0xff]
    %v89 = vld [vmem:[#allocation6 + $0x68] sm:$0xff]
    %v90 = vld [vmem:[#allocation6 + $0x70] sm:$0xff]
    %v91 = vld [vmem:[#allocation6 + $0x78] sm:$0xff]
    %v92 = vld [vmem:[%s2] sm:$0x1]
    %v94 = vperm.slane %v92, 0
    %96 = vmatpush.msra.mxu0 %v91
    %97 = vmatpush.msra.mxu0 %v90
    %98 = vmatpush.msra.mxu0 %v89
    %99 = vmatpush.msra.mxu0 %v88
    %100 = vmatpush.msra.mxu0 %v87
    %101 = vmatpush.msra.mxu0 %v86
    %102 = vmatpush.msra.mxu0 %v85
    %103 = vmatpush.msra.mxu0 %v84
    %104 = vmatpush.msra.mxu0 %v83
    %105 = vmatpush.msra.mxu0 %v82
    %106 = vmatpush.msra.mxu0 %v81
    %107 = vmatpush.msra.mxu0 %v80
    %108 = vmatpush.msra.mxu0 %v79
    %109 = vmatpush.msra.mxu0 %v78
    %110 = vmatpush.msra.mxu0 %v77
    %111 = vmatpush.msra.mxu0 %v76
    %112 = vmatmul.f32.gmra.mxu0 %v74
    %v113 = vpop.f32.mrf.mxu0
    %v114 = vadd.f32 %v94, %v113
    %115 = vmatmul.f32.gmra.mxu0 %v75
    %v116 = vpop.f32.mrf.mxu0
    %v117 = vadd.f32 %v94, %v116
    %118 = vdwg.mxu0
    %v119 = vmul.f32 %v114, 0.5
    %v120 = vmul.f32 %v117, 0.5
    %v121 = vmul.f32 %v114, 0.70710677
    %v122 = vmul.f32 %v117, 0.70710677
    %v123 = vand.u32 2147483647, %v121
    %v124 = vand.u32 2147483647, %v122
    %v125 = vmul.f32 %v123, 0.3275911
    %v126 = vmul.f32 %v124, 0.3275911
    %v127 = vadd.f32 %v125, 1.0
    %v128 = vadd.f32 %v126, 1.0
    %v129 = vrcp.pop %v127
    %v130 = vmul.f32 %v127, %v129
    %v131 = vsub.f32 1.0, %v130
    %v132 = vmul.f32 %v129, %v131
    %v133 = vadd.f32 %v129, %v132
    %vm134 = vweird.f32 %v127
    %vm135 = vweird.f32 %v129
    %vm136 = vmor %vm134, %vm135
    %v137 = vsel %vm136, %v129, %v133
    %v138 = vand.u32 2147483647, %v127
    %vm139 = vcmp.eq.f32.partialorder %v138, 8.507059e+37
    %v140 = vand.u32 %v127, 2147483648
    %v141 = vor.u32 1.1754944e-38, %v140
    %v142 = vsel %vm139, %v141, %v137
    %v143 = vmul.f32 1.0, %v142
    %v144 = vrcp.pop %v128
    %v145 = vmul.f32 %v128, %v144
    %v146 = vsub.f32 1.0, %v145
    %v147 = vmul.f32 %v144, %v146
    %v148 = vadd.f32 %v144, %v147
    %vm149 = vweird.f32 %v128
    %vm150 = vweird.f32 %v144
    %vm151 = vmor %vm149, %vm150
    %v152 = vsel %vm151, %v144, %v148
    %v153 = vand.u32 2147483647, %v128
    %vm154 = vcmp.eq.f32.partialorder %v153, 8.507059e+37
    %v155 = vand.u32 %v128, 2147483648
    %v156 = vor.u32 1.1754944e-38, %v155
    %v157 = vsel %vm154, %v156, %v152
    %v158 = vmul.f32 1.0, %v157
    %v159 = vmul.f32 %v143, 1.0614054
    %v160 = vmul.f32 %v158, 1.0614054
    %v161 = vadd.f32 %v159, -1.4531521
    %v162 = vadd.f32 %v160, -1.4531521
    %v163 = vmul.f32 %v143, %v161
    %v164 = vmul.f32 %v158, %v162
    %v165 = vadd.f32 %v163, 1.4214138
    %v166 = vadd.f32 %v164, 1.4214138
    %v167 = vmul.f32 %v143, %v165
    %v168 = vmul.f32 %v158, %v166
    %v169 = vadd.f32 %v167, -0.28449672
    %v170 = vadd.f32 %v168, -0.28449672
    %v171 = vmul.f32 %v143, %v169
    %v172 = vmul.f32 %v158, %v170
    %v173 = vadd.f32 %v171, 0.2548296
    %v174 = vadd.f32 %v172, 0.2548296
    %v175 = vmul.f32 %v143, %v173
    %v176 = vmul.f32 %v158, %v174
    %v177 = vsub.f32 0.0, %v123
    %v178 = vsub.f32 0.0, %v124
    %v179 = vmul.f32 %v177, %v123
    %v180 = vmul.f32 %v178, %v124
    %v181 = vmul.f32 %v179, 1.442695
    %v182 = vpow.pop %v181
    %v183 = vmul.f32 %v180, 1.442695
    %v184 = vpow.pop %v183
    %v185 = vmul.f32 %v175, %v182
    %v186 = vmul.f32 %v176, %v184
    %v187 = vsub.f32 1.0, %v185
    %v188 = vsub.f32 1.0, %v186
    %vm189 = vcmp.ge.f32.partialorder %v121, 0.0
    %vm190 = vcmp.ge.f32.partialorder %v122, 0.0
    %v191 = vsub.f32 0.0, %v187
    %v192 = vsub.f32 0.0, %v188
    %v193 = vsel %vm189, %v187, %v191
    %v194 = vsel %vm190, %v188, %v192
    %v195 = vadd.f32 %v193, 1.0
    %v196 = vadd.f32 %v194, 1.0
    %v197 = vmul.f32 %v119, %v195
    %v198 = vmul.f32 %v120, %v196
    %v199 = vld [vmem:[#allocation2] sm:$0xff]
    %v200 = vld [vmem:[#allocation2 + $0x8] sm:$0xff]
    %v201 = vld [vmem:[#allocation8] sm:$0xff]
    %v202 = vld [vmem:[#allocation8 + $0x8] sm:$0xff]
    %v203 = vld [vmem:[#allocation8 + $0x10] sm:$0xff]
    %v204 = vld [vmem:[#allocation8 + $0x18] sm:$0xff]
    %v205 = vld [vmem:[#allocation8 + $0x20] sm:$0xff]
    %v206 = vld [vmem:[#allocation8 + $0x28] sm:$0xff]
    %v207 = vld [vmem:[#allocation8 + $0x30] sm:$0xff]
    %v208 = vld [vmem:[#allocation8 + $0x38] sm:$0xff]
    %v209 = vld [vmem:[#allocation8 + $0x40] sm:$0xff]
    %v210 = vld [vmem:[#allocation8 + $0x48] sm:$0xff]
    %v211 = vld [vmem:[#allocation8 + $0x50] sm:$0xff]
    %v212 = vld [vmem:[#allocation8 + $0x58] sm:$0xff]
    %v213 = vld [vmem:[#allocation8 + $0x60] sm:$0xff]
    %v214 = vld [vmem:[#allocation8 + $0x68] sm:$0xff]
    %v215 = vld [vmem:[#allocation8 + $0x70] sm:$0xff]
    %v216 = vld [vmem:[#allocation8 + $0x78] sm:$0xff]
    %217 = vmatpush.msra.mxu0 %v216
    %218 = vmatpush.msra.mxu0 %v215
    %219 = vmatpush.msra.mxu0 %v214
    %220 = vmatpush.msra.mxu0 %v213
    %221 = vmatpush.msra.mxu0 %v212
    %222 = vmatpush.msra.mxu0 %v211
    %223 = vmatpush.msra.mxu0 %v210
    %224 = vmatpush.msra.mxu0 %v209
    %225 = vmatpush.msra.mxu0 %v208
    %226 = vmatpush.msra.mxu0 %v207
    %227 = vmatpush.msra.mxu0 %v206
    %228 = vmatpush.msra.mxu0 %v205
    %229 = vmatpush.msra.mxu0 %v204
    %230 = vmatpush.msra.mxu0 %v203
    %231 = vmatpush.msra.mxu0 %v202
    %232 = vmatpush.msra.mxu0 %v201
    %233 = vmatmul.f32.gmra.mxu0 %v197
    %v234 = vpop.f32.mrf.mxu0
    %v235 = vadd.f32 0.0, %v234
    %236 = vmatmul.f32.gmra.mxu0 %v198
    %v237 = vpop.f32.mrf.mxu0
    %v238 = vadd.f32 0.0, %v237
    %239 = vdwg.mxu0
    %v240 = vadd.f32 %v199, %v235
    %v241 = vadd.f32 %v200, %v238
    %242 = vst [vmem:[#allocation2] sm:$0xff] %v240
    %243 = vst [vmem:[#allocation2 + $0x8] sm:$0xff] %v241
    // Predicated region
    $region38: #{tpu_custom_call.1} parent=1 // pred_check
      %p244 = pneg %p68
    $region39: #{tpu_custom_call.1} parent=1 // pred_check_branch
      %246 = sbr.rel (%p244) target = $region41
    $region40: #{tpu_custom_call.1} parent=1 // pred_region
      %v247 = vld [vmem:[#allocation2] sm:$0xff]
      %v248 = vld [vmem:[#allocation2 + $0x8] sm:$0xff]
      %v249 = vld [vmem:[%s4] sm:$0x1]
      %v251 = vperm.slane %v249, 0
      %v253 = vadd.f32 %v247, %v251
      %v254 = vadd.f32 %v248, %v251
      %255 = vst [vmem:[#allocation9] sm:$0xff] %v253
      %256 = vst [vmem:[#allocation9 + $0x8] sm:$0xff] %v254
    $region41: #{tpu_custom_call.1} parent=1 // pred_fallthru
      _
    // Predicated region
    $region42: #{tpu_custom_call.1} parent=1 // pred_check
      _
    $region43: #{tpu_custom_call.1} parent=1 // pred_check_branch
      %258 = sbr.rel (0) target = $region45
    $region44: #{tpu_custom_call.1} parent=1 // pred_region
      %260 = vsyncadd [#allocation5], 0
      %s261 = sshll.u32 [#allocation9], 4
      %s262 = int_to_ptr.vmem [resolvable:$true] %s261
      %s263 = sshll.u32 %s5, 4
      %s264 = int_to_ptr.hbm [resolvable:$true] %s263
      %269 = dma.vmem_to_hbm [thread:$0]  %s262, 256, %s264, [#allocation5], 128, 128, 8
    $region45: #{tpu_custom_call.1} parent=1 // pred_fallthru
      _
    // Predicated region
    $region46: #{tpu_custom_call.1} parent=1 // pred_check
      _
    $region47: #{tpu_custom_call.1} parent=1 // pred_check_branch
      %271 = sbr.rel (0) target = $region49
    $region48: #{tpu_custom_call.1} parent=1 // pred_region
      %273 = dma.done [#allocation5], 256
    $region49: #{tpu_custom_call.1} parent=1 // pred_fallthru
      _
    %274 = vsyncpa [#allocation4], 1
    %275 = vsyncpa [#allocation7], 1
    %276 = vsyncpa [#allocation5], 1

</llo_original>
